<compile_context>
chip_gen: v6e
topology: v6e:2x2x1
jax: 0.10.0
libtpu: 0.0.40
codegen_flags: <defaults>
</compile_context>

<pallas_src>
import functools

import jax
import jax.numpy as jnp
from jax.experimental import pallas as pl
from jax.experimental.pallas import tpu as pltpu


_TB = 4096  # batch columns (lane axis) per grid step; sweep 2048/4096/8192.

_HAS_INKERNEL_RNG = all(hasattr(pltpu, n) for n in ("prng_seed", "stateful_normal"))


def _device_kind():
    try:
        return jax.devices()[0].device_kind.lower()
    except Exception:
        return ""


def _has_bf16_eup():
    k = _device_kind()
    return ("v6" in k) or ("v7" in k)


def _is_v7():
    return "v7" in _device_kind()


# ---------------------------------------------------------------------------
# Pallas kernel: fused extended-obs build + 3-layer tanh MLP (+ fused sampling)
# Feature-major layout: activations are (F, TB) with batch on the lane axis,
# so every store is lane-dense and EUP/VPU lanes are fully populated.
# ---------------------------------------------------------------------------
def _policy_kernel(*refs, noise_mode, mxu_dtype, act_dtype):
    # noise_mode: 0 = deterministic, 1 = in-kernel PRNG, 2 = noise passed as input
    if noise_mode == 0:
        (obs_ref, lat_ref, w1_ref, b1_ref, w2_ref, b2_ref, w3_ref, b3_ref,
         out_ref, ext_ref) = refs
    elif noise_mode == 1:
        (obs_ref, lat_ref, w1_ref, b1_ref, w2_ref, b2_ref, w3_ref, b3_ref,
         std_ref, seed_ref, out_ref, ext_ref) = refs
    else:
        (obs_ref, lat_ref, w1_ref, b1_ref, w2_ref, b2_ref, w3_ref, b3_ref,
         std_ref, noise_ref, out_ref, ext_ref) = refs

    obs = obs_ref[...].astype(jnp.float32)    # (2, TB)
    lat = lat_ref[...].astype(jnp.float32)    # (4, TB)

    # Packed extended observation: every group starts at an 8-aligned sublane
    # offset (plain masked stores, no sublane rotation); the pad rows stay zero
    # every iteration so the matching zero weight columns contribute nothing.
    ext_ref[...] = jnp.zeros_like(ext_ref)
    ext_ref[0:2, :] = obs                     # obs features
    ext_ref[8:12, :] = lat                    # latent features
    ext_ref[16:20, :] = lat * obs[0:1, :]     # outer-product block for obs[:,0]
    ext_ref[24:28, :] = lat * obs[1:2, :]     # outer-product block for obs[:,1]

    def mm(w_ref, x):
        return jnp.dot(w_ref[...], x, preferred_element_type=jnp.float32)

    pre1 = mm(w1_ref, ext_ref[...].astype(mxu_dtype)) + b1_ref[...]   # (64, TB) f32
    h1 = jnp.tanh(pre1.astype(act_dtype)).astype(mxu_dtype)           # bf16 EUP on v6e/v7x
    pre2 = mm(w2_ref, h1) + b2_ref[...]
    h2 = jnp.tanh(pre2.astype(act_dtype)).astype(mxu_dtype)
    mean = jnp.tanh(mm(w3_ref, h2) + b3_ref[...])                     # (2, TB) f32

    if noise_mode == 1:
        # torch.normal(mean, std): noise generated in-kernel; seed offset by the
        # grid step so blocks (and cores under CORE_PARALLEL) never repeat noise.
        pltpu.prng_seed(seed_ref[0], pl.program_id(0))
        noise = pltpu.stateful_normal(mean.shape, jnp.float32)
        mean = mean + noise * std_ref[...]
    elif noise_mode == 2:
        mean = mean + noise_ref[...].astype(jnp.float32) * std_ref[...]

    out_ref[...] = mean.astype(out_ref.dtype)   # lane-dense (2, TB) store


# ---------------------------------------------------------------------------
# Wrapper: cdiv batch grid (no padding), VMEM-resident weights
# ---------------------------------------------------------------------------
def _policy_pallas(obs_t, lat_t, params, *, mxu_dtype, act_dtype,
                   std=None, seed=None, noise_t=None):
    w1p, b1, w2t, b2, w3t, b3 = params
    B = obs_t.shape[1]

    tb = B if B <= _TB else _TB          # single block == full array for small B
    nb = pl.cdiv(B, tb)                  # ragged last block handled by masking

    def bspec(rows):
        return pl.BlockSpec((rows, tb), lambda i: (0, i))

    def cspec(arr):                      # constant index_map -> VMEM-resident
        return pl.BlockSpec(arr.shape, lambda i: (0, 0))

    if std is None:
        noise_mode = 0
    elif seed is not None:
        noise_mode = 1
    else:
        noise_mode = 2

    inputs = [obs_t, lat_t, w1p, b1, w2t, b2, w3t, b3]
    in_specs = [bspec(2), bspec(4)] + [cspec(a) for a in (w1p, b1, w2t, b2, w3t, b3)]
    if noise_mode:
        inputs.append(std)
        in_specs.append(cspec(std))
        if noise_mode == 1:
            inputs.append(seed)
            in_specs.append(pl.BlockSpec(memory_space=pltpu.MemorySpace.SMEM))
        else:
            inputs.append(noise_t)
            in_specs.append(bspec(2))

    if nb > 1 and _is_v7() and hasattr(pltpu, "CORE_PARALLEL"):
        semantics = (pltpu.CORE_PARALLEL,)   # shard batch axis across v7x's 2 TCs
    else:
        semantics = ("parallel",)

    in_bytes = 6 * obs_t.dtype.itemsize * B + (8 * B if noise_mode == 2 else 0)
    cost = pl.CostEstimate(
        flops=2 * (32 * 64 + 64 * 64 + 64 * 2) * B,
        transcendentals=130 * B,
        bytes_accessed=in_bytes + 8 * B)

    kernel = functools.partial(_policy_kernel, noise_mode=noise_mode,
                               mxu_dtype=mxu_dtype, act_dtype=act_dtype)
    return pl.pallas_call(
        kernel,
        grid=(nb,),
        in_specs=in_specs,
        out_specs=pl.BlockSpec((2, tb), lambda i: (0, i)),
        out_shape=jax.ShapeDtypeStruct((2, B), jnp.float32),
        scratch_shapes=[pltpu.VMEM((32, tb), jnp.float32)],
        compiler_params=pltpu.CompilerParams(dimension_semantics=semantics),
        cost_estimate=cost,
    )(*inputs)


# ---------------------------------------------------------------------------
# PmSkillPolicy forward (JAX glue + fused Pallas kernel)
# ---------------------------------------------------------------------------
class PmSkillPolicyPallas:
    """JAX/Pallas re-implementation of PmSkillPolicy.forward."""

    def __init__(self, params_list, n_latents=4, use_bf16=True, bf16_tanh=None):
        assert n_latents == 4
        self.skill_dim = 2
        self.use_bf16 = bool(use_bf16)
        self.mxu_dtype = jnp.bfloat16 if self.use_bf16 else jnp.float32
        if bf16_tanh is None:
            bf16_tanh = self.use_bf16 and _has_bf16_eup()   # bf16 EUP: v6e/v7x only
        self.act_dtype = jnp.bfloat16 if bf16_tanh else jnp.float32

        # params_list layout mirrors the PyTorch ctor (weights stored (in,out)):
        # [W1(14,64), b1(64,), W2(64,64), b2(64,), W3(64,2), b3(2,), log_std(2,)]
        w1 = jnp.asarray(params_list[0], jnp.float32)
        b1 = jnp.asarray(params_list[1], jnp.float32)
        w2 = jnp.asarray(params_list[2], jnp.float32)
        b2 = jnp.asarray(params_list[3], jnp.float32)
        w3 = jnp.asarray(params_list[4], jnp.float32)
        b3 = jnp.asarray(params_list[5], jnp.float32)
        log_std = jnp.asarray(params_list[6], jnp.float32)

        md = self.mxu_dtype
        # Packed W1^T (64, 32) matching the in-kernel ext layout; zero columns
        # at the pad rows so the (never-materialized-in-HBM) extended obs needs
        # only one MXU matmul.
        w1p = jnp.zeros((64, 32), jnp.float32)
        w1p = w1p.at[:, 0:2].set(w1[0:2, :].T)       # obs
        w1p = w1p.at[:, 8:12].set(w1[2:6, :].T)      # latents
        w1p = w1p.at[:, 16:20].set(w1[6:10, :].T)    # obs[:,0] * latents
        w1p = w1p.at[:, 24:28].set(w1[10:14, :].T)   # obs[:,1] * latents
        self.params = (w1p.astype(md), b1.reshape(64, 1), w2.T.astype(md),
                       b2.reshape(64, 1), w3.T.astype(md), b3.reshape(2, 1))
        self.std = jnp.exp(log_std).reshape(2, 1)

        self._noise_calls = 0
        self._inkernel_rng = _HAS_INKERNEL_RNG
        self._rng_probed = False

    def forward(self, observations, latents, deterministic=False, key=None):
        obs = jnp.asarray(observations, jnp.float32)   # (B, 2)
        lat = jnp.asarray(latents, jnp.float32)        # (B, 4)
        B = obs.shape[0]

        # Layout plumbing: batch goes on the lane axis; inputs shipped in the
        # MXU dtype (bf16) to halve kernel input HBM bytes.
        obs_t = obs.T.astype(self.mxu_dtype)           # (2, B)
        lat_t = lat.T.astype(self.mxu_dtype)           # (4, B)

        call = functools.partial(_policy_pallas, obs_t, lat_t, self.params,
                                 mxu_dtype=self.mxu_dtype,
                                 act_dtype=self.act_dtype)
        if deterministic:
            return call().T

        if key is None:
            # Vary the default seed per call so repeated calls don't reuse noise.
            key = jax.random.PRNGKey(self._noise_calls)
        self._noise_calls += 1

        if self._inkernel_rng:
            seed = jax.random.randint(key, (1,), 0, jnp.iinfo(jnp.int32).max,
                                      dtype=jnp.int32)
            if self._rng_probed:
                return call(std=self.std, seed=seed).T
            try:
                out_t = jax.block_until_ready(call(std=self.std, seed=seed))
                self._rng_probed = True
                return out_t.T
            except Exception:
                self._inkernel_rng = False   # fall back to host-side noise input

        noise_t = jax.random.normal(key, (2, B), jnp.float32)
        return call(std=self.std, noise_t=noise_t).T


# ---------------------------------------------------------------------------
# Pure-JAX reference for validation
# ---------------------------------------------------------------------------
def _reference_forward(obs, lat, params_list):
    outer = (obs[:, :, None] * lat[:, None, :]).reshape(obs.shape[0], -1)
    ext = jnp.concatenate([obs, lat, outer], axis=1)
    h1 = jnp.tanh(ext @ params_list[0] + params_list[1])
    h2 = jnp.tanh(h1 @ params_list[2] + params_list[3])
    return jnp.tanh(h2 @ params_list[4] + params_list[5])


if __name__ == "__main__":
    key = jax.random.PRNGKey(0)
    keys = jax.random.split(key, 12)

    # Deterministic synthetic parameters (shapes from the module __init__).
    params_list = [
        0.1 * jax.random.normal(keys[0], (14, 64), jnp.float32),  # W1 (in,out)
        0.1 * jax.random.normal(keys[1], (64,), jnp.float32),     # b1
        0.1 * jax.random.normal(keys[2], (64, 64), jnp.float32),  # W2
        0.1 * jax.random.normal(keys[3], (64,), jnp.float32),     # b2
        0.1 * jax.random.normal(keys[4], (64, 2), jnp.float32),   # W3
        0.1 * jax.random.normal(keys[5], (2,), jnp.float32),      # b3
        -1.0 * jnp.ones((2,), jnp.float32),                       # log_std
    ]

    policy = PmSkillPolicyPallas(params_list, n_latents=4)
    tol = 3e-2 if policy.use_bf16 else 1e-5

    # Small batch, deterministic path (actions == mean).
    B = 8
    observations = jax.random.normal(keys[6], (B, 2), jnp.float32)
    latents = jax.nn.one_hot(jax.random.randint(keys[7], (B,), 0, 4), 4,
                             dtype=jnp.float32)
    actions_det = jax.block_until_ready(
        policy.forward(observations, latents, deterministic=True))
    assert actions_det.shape == (B, 2)
    ref = _reference_forward(observations, latents, params_list)
    assert jnp.allclose(actions_det, ref, atol=tol, rtol=tol), "small-batch mismatch"

    # Multi-block gridded path with a ragged tail (no padding in the wrapper).
    B2 = 5000
    obs2 = jax.random.normal(keys[8], (B2, 2), jnp.float32)
    lat2 = jax.nn.one_hot(jax.random.randint(keys[9], (B2,), 0, 4), 4,
                          dtype=jnp.float32)
    act2 = jax.block_until_ready(policy.forward(obs2, lat2, deterministic=True))
    ref2 = _reference_forward(obs2, lat2, params_list)
    assert jnp.allclose(act2, ref2, atol=tol, rtol=tol), "gridded mismatch"

    # Stochastic path: actions = mean + N(0,1) * exp(log_std), fused in-kernel.
    act_s = jax.block_until_ready(
        policy.forward(obs2, lat2, deterministic=False, key=keys[10]))
    assert act_s.shape == (B2, 2)
    assert bool(jnp.all(jnp.isfinite(act_s)))
    noise = (act_s - act2) / jnp.exp(params_list[6])[None, :]
    assert 0.85 < float(jnp.std(noise)) < 1.15, "noise std off"
    assert abs(float(jnp.mean(noise))) < 0.05, "noise mean off"

    print("KERNEL_OK")
</pallas_src>

<mosaic_0001>
module attributes {stable_mosaic.version = 11 : i64} {
  func.func @_policy_kernel(%arg0: i32, %arg1: memref<2x8xbf16, #tpu.memory_space<vmem>>, %arg2: memref<4x8xbf16, #tpu.memory_space<vmem>>, %arg3: memref<64x32xbf16, #tpu.memory_space<vmem>>, %arg4: memref<64x1xf32, #tpu.memory_space<vmem>>, %arg5: memref<64x64xbf16, #tpu.memory_space<vmem>>, %arg6: memref<64x1xf32, #tpu.memory_space<vmem>>, %arg7: memref<2x64xbf16, #tpu.memory_space<vmem>>, %arg8: memref<2x1xf32, #tpu.memory_space<vmem>>, %arg9: memref<2x8xf32, #tpu.memory_space<vmem>>, %arg10: memref<32x8xf32, #tpu.memory_space<vmem>>) attributes {dimension_semantics = [#tpu.dimension_semantics<parallel>], iteration_bounds = array<i64: 1>, scalar_prefetch = 0 : i64, scratch_operands = 1 : i64, tpu.core_type = #tpu.core_type<tc>, window_params = [{transform_indices = @transform_0, window_bounds = array<i64: 2, 8>}, {transform_indices = @transform_1, window_bounds = array<i64: 4, 8>}, {pipeline_mode = #tpu.pipeline_mode<synchronous>, transform_indices = @transform_2, window_bounds = array<i64: 64, 32>}, {pipeline_mode = #tpu.pipeline_mode<synchronous>, transform_indices = @transform_3, window_bounds = array<i64: 64, 1>}, {pipeline_mode = #tpu.pipeline_mode<synchronous>, transform_indices = @transform_4, window_bounds = array<i64: 64, 64>}, {pipeline_mode = #tpu.pipeline_mode<synchronous>, transform_indices = @transform_5, window_bounds = array<i64: 64, 1>}, {pipeline_mode = #tpu.pipeline_mode<synchronous>, transform_indices = @transform_6, window_bounds = array<i64: 2, 64>}, {pipeline_mode = #tpu.pipeline_mode<synchronous>, transform_indices = @transform_7, window_bounds = array<i64: 2, 1>}, {transform_indices = @transform_8, window_bounds = array<i64: 2, 8>}]} {
    %c0 = arith.constant 0 : index
    %c0_0 = arith.constant 0 : index
    %0 = vector.load %arg1[%c0, %c0_0] : memref<2x8xbf16, #tpu.memory_space<vmem>>, vector<2x8xbf16>
    %1 = arith.extf %0 : vector<2x8xbf16> to vector<2x8xf32>
    %c0_1 = arith.constant 0 : index
    %c0_2 = arith.constant 0 : index
    %2 = vector.load %arg2[%c0_1, %c0_2] : memref<4x8xbf16, #tpu.memory_space<vmem>>, vector<4x8xbf16>
    %3 = arith.extf %2 : vector<4x8xbf16> to vector<4x8xf32>
    %cst = arith.constant 0.000000e+00 : f32
    %4 = vector.broadcast %cst : f32 to vector<32x8xf32>
    %c0_3 = arith.constant 0 : index
    %c0_4 = arith.constant 0 : index
    %5 = vector.load %arg10[%c0_3, %c0_4] : memref<32x8xf32, #tpu.memory_space<vmem>>, vector<32x8xf32>
    tpu.vector_store %arg10[%c0_3, %c0_4], %4 {strides = array<i32>} : memref<32x8xf32, #tpu.memory_space<vmem>>, vector<32x8xf32>,
    %c0_5 = arith.constant 0 : index
    %c0_6 = arith.constant 0 : index
    %6 = vector.load %arg10[%c0_5, %c0_6] : memref<32x8xf32, #tpu.memory_space<vmem>>, vector<2x8xf32>
    tpu.vector_store %arg10[%c0_5, %c0_6], %1 {strides = array<i32>} : memref<32x8xf32, #tpu.memory_space<vmem>>, vector<2x8xf32>,
    %c8 = arith.constant 8 : index
    %c0_7 = arith.constant 0 : index
    %7 = vector.load %arg10[%c8, %c0_7] : memref<32x8xf32, #tpu.memory_space<vmem>>, vector<4x8xf32>
    tpu.vector_store %arg10[%c8, %c0_7], %3 {strides = array<i32>} : memref<32x8xf32, #tpu.memory_space<vmem>>, vector<4x8xf32>,
    %8 = vector.extract_strided_slice %1 {offsets = [0, 0], sizes = [1, 8], strides = [1, 1]} : vector<2x8xf32> to vector<1x8xf32>
    %9 = vector.broadcast %8 : vector<1x8xf32> to vector<4x8xf32>
    %10 = arith.mulf %3, %9 : vector<4x8xf32>
    %c16 = arith.constant 16 : index
    %c0_8 = arith.constant 0 : index
    %11 = vector.load %arg10[%c16, %c0_8] : memref<32x8xf32, #tpu.memory_space<vmem>>, vector<4x8xf32>
    tpu.vector_store %arg10[%c16, %c0_8], %10 {strides = array<i32>} : memref<32x8xf32, #tpu.memory_space<vmem>>, vector<4x8xf32>,
    %12 = vector.extract_strided_slice %1 {offsets = [1, 0], sizes = [1, 8], strides = [1, 1]} : vector<2x8xf32> to vector<1x8xf32>
    %13 = vector.broadcast %12 : vector<1x8xf32> to vector<4x8xf32>
    %14 = arith.mulf %3, %13 : vector<4x8xf32>
    %c24 = arith.constant 24 : index
    %c0_9 = arith.constant 0 : index
    %15 = vector.load %arg10[%c24, %c0_9] : memref<32x8xf32, #tpu.memory_space<vmem>>, vector<4x8xf32>
    tpu.vector_store %arg10[%c24, %c0_9], %14 {strides = array<i32>} : memref<32x8xf32, #tpu.memory_space<vmem>>, vector<4x8xf32>,
    %c0_10 = arith.constant 0 : index
    %c0_11 = arith.constant 0 : index
    %16 = vector.load %arg10[%c0_10, %c0_11] : memref<32x8xf32, #tpu.memory_space<vmem>>, vector<32x8xf32>
    %17 = arith.truncf %16 : vector<32x8xf32> to vector<32x8xbf16>
    %c0_12 = arith.constant 0 : index
    %c0_13 = arith.constant 0 : index
    %18 = vector.load %arg3[%c0_12, %c0_13] : memref<64x32xbf16, #tpu.memory_space<vmem>>, vector<64x32xbf16>
    %cst_14 = arith.constant dense<0.000000e+00> : vector<64x8xf32>
    %19 = tpu.matmul %18, %17, %cst_14 {dimension_numbers = #tpu.dot_dimension_numbers<[1], [0], [0], [1], [0, 0, 1, 1], [], []>} : vector<64x32xbf16>, vector<32x8xbf16>, vector<64x8xf32> -> vector<64x8xf32>
    %c0_15 = arith.constant 0 : index
    %c0_16 = arith.constant 0 : index
    %20 = vector.load %arg4[%c0_15, %c0_16] : memref<64x1xf32, #tpu.memory_space<vmem>>, vector<64x1xf32>
    %21 = vector.broadcast %20 : vector<64x1xf32> to vector<64x8xf32>
    %22 = arith.addf %19, %21 : vector<64x8xf32>
    %23 = math.tanh %22 : vector<64x8xf32>
    %24 = arith.truncf %23 : vector<64x8xf32> to vector<64x8xbf16>
    %c0_17 = arith.constant 0 : index
    %c0_18 = arith.constant 0 : index
    %25 = vector.load %arg5[%c0_17, %c0_18] : memref<64x64xbf16, #tpu.memory_space<vmem>>, vector<64x64xbf16>
    %cst_19 = arith.constant dense<0.000000e+00> : vector<64x8xf32>
    %26 = tpu.matmul %25, %24, %cst_19 {dimension_numbers = #tpu.dot_dimension_numbers<[1], [0], [0], [1], [0, 0, 1, 1], [], []>} : vector<64x64xbf16>, vector<64x8xbf16>, vector<64x8xf32> -> vector<64x8xf32>
    %c0_20 = arith.constant 0 : index
    %c0_21 = arith.constant 0 : index
    %27 = vector.load %arg6[%c0_20, %c0_21] : memref<64x1xf32, #tpu.memory_space<vmem>>, vector<64x1xf32>
    %28 = vector.broadcast %27 : vector<64x1xf32> to vector<64x8xf32>
    %29 = arith.addf %26, %28 : vector<64x8xf32>
    %30 = math.tanh %29 : vector<64x8xf32>
    %31 = arith.truncf %30 : vector<64x8xf32> to vector<64x8xbf16>
    %c0_22 = arith.constant 0 : index
    %c0_23 = arith.constant 0 : index
    %32 = vector.load %arg7[%c0_22, %c0_23] : memref<2x64xbf16, #tpu.memory_space<vmem>>, vector<2x64xbf16>
    %cst_24 = arith.constant dense<0.000000e+00> : vector<2x8xf32>
    %33 = tpu.matmul %32, %31, %cst_24 {dimension_numbers = #tpu.dot_dimension_numbers<[1], [0], [0], [1], [0, 0, 1, 1], [], []>} : vector<2x64xbf16>, vector<64x8xbf16>, vector<2x8xf32> -> vector<2x8xf32>
    %c0_25 = arith.constant 0 : index
    %c0_26 = arith.constant 0 : index
    %34 = vector.load %arg8[%c0_25, %c0_26] : memref<2x1xf32, #tpu.memory_space<vmem>>, vector<2x1xf32>
    %35 = vector.broadcast %34 : vector<2x1xf32> to vector<2x8xf32>
    %36 = arith.addf %33, %35 : vector<2x8xf32>
    %37 = math.tanh %36 : vector<2x8xf32>
    %c0_27 = arith.constant 0 : index
    %c0_28 = arith.constant 0 : index
    %38 = vector.load %arg9[%c0_27, %c0_28] : memref<2x8xf32, #tpu.memory_space<vmem>>, vector<2x8xf32>
    tpu.vector_store %arg9[%c0_27, %c0_28], %37 {strides = array<i32>} : memref<2x8xf32, #tpu.memory_space<vmem>>, vector<2x8xf32>,
    return
  }
  func.func @transform_0(%arg0: i32) -> (i32, i32) {
    %c0_i32 = arith.constant 0 : i32
    %c0_i32_0 = arith.constant 0 : i32
    return %c0_i32, %arg0 : i32, i32
  }
  func.func @transform_1(%arg0: i32) -> (i32, i32) {
    %c0_i32 = arith.constant 0 : i32
    %c0_i32_0 = arith.constant 0 : i32
    return %c0_i32, %arg0 : i32, i32
  }
  func.func @transform_2(%arg0: i32) -> (i32, i32) {
    %c0_i32 = arith.constant 0 : i32
    %c0_i32_0 = arith.constant 0 : i32
    %c0_i32_1 = arith.constant 0 : i32
    return %c0_i32, %c0_i32_0 : i32, i32
  }
  func.func @transform_3(%arg0: i32) -> (i32, i32) {
    %c0_i32 = arith.constant 0 : i32
    %c0_i32_0 = arith.constant 0 : i32
    %c0_i32_1 = arith.constant 0 : i32
    return %c0_i32, %c0_i32_0 : i32, i32
  }
  func.func @transform_4(%arg0: i32) -> (i32, i32) {
    %c0_i32 = arith.constant 0 : i32
    %c0_i32_0 = arith.constant 0 : i32
    %c0_i32_1 = arith.constant 0 : i32
    return %c0_i32, %c0_i32_0 : i32, i32
  }
  func.func @transform_5(%arg0: i32) -> (i32, i32) {
    %c0_i32 = arith.constant 0 : i32
    %c0_i32_0 = arith.constant 0 : i32
    %c0_i32_1 = arith.constant 0 : i32
    return %c0_i32, %c0_i32_0 : i32, i32
  }
  func.func @transform_6(%arg0: i32) -> (i32, i32) {
    %c0_i32 = arith.constant 0 : i32
    %c0_i32_0 = arith.constant 0 : i32
    %c0_i32_1 = arith.constant 0 : i32
    return %c0_i32, %c0_i32_0 : i32, i32
  }
  func.func @transform_7(%arg0: i32) -> (i32, i32) {
    %c0_i32 = arith.constant 0 : i32
    %c0_i32_0 = arith.constant 0 : i32
    %c0_i32_1 = arith.constant 0 : i32
    return %c0_i32, %c0_i32_0 : i32, i32
  }
  func.func @transform_8(%arg0: i32) -> (i32, i32) {
    %c0_i32 = arith.constant 0 : i32
    %c0_i32_0 = arith.constant 0 : i32
    return %c0_i32, %arg0 : i32, i32
  }
}

</mosaic_0001>

<llo_original>
// kernel: tpu_custom_call.1
$region0: #{tpu_custom_call.1}
  #allocation0 [shape = 'u32[]', space=smem, size = 0x4, offset = 0x4, fixed_abs, tag = 'smem constant byte address 0x4 - core index']
  #allocation1 [shape = 'u32[144,128]{1,0:T(1,128)}', space=vmem, size = 0x12000, scoped, tag = 'internal scratch']
  #allocation2 [shape = 'f32[32,8]{1,0:T(8,128)}', space=vmem, size = 0x4000, scoped, tag = 'scratch operand']
  %s0 = inlined_call_operand.vmem [shape: bf16[2,8], index: 0, kind: input, shape index: {}]
  %s1 = inlined_call_operand.vmem [shape: bf16[4,8], index: 1, kind: input, shape index: {}]
  %s2 = inlined_call_operand.vmem [shape: bf16[64,32], index: 2, kind: input, shape index: {}]
  %s3 = inlined_call_operand.vmem [shape: f32[64,1], index: 3, kind: input, shape index: {}]
  %s4 = inlined_call_operand.vmem [shape: bf16[64,64], index: 4, kind: input, shape index: {}]
  %s5 = inlined_call_operand.vmem [shape: f32[64,1], index: 5, kind: input, shape index: {}]
  %s6 = inlined_call_operand.vmem [shape: bf16[2,64], index: 6, kind: input, shape index: {}]
  %s7 = inlined_call_operand.vmem [shape: f32[2,1], index: 7, kind: input, shape index: {}]
  %s8 = inlined_call_operand.hbm [shape: f32[2,8], index: 8, kind: output, shape index: {}]
  %s9 = sld [smem:[#allocation0]]
  $region42: #{tpu_custom_call.1} parent=0
    _
  %s11 = ssub.s32 1, %s9
  %s12 = scalar_select 0, %s11, %s9
  $region1: #{tpu_custom_call.1} parent=0
    #allocation3 [shape = 'u8[1024]{0}', space=vmem, size = 0x400, scoped, tag = 'output window, operand 0, single buffered']
    #allocation4 [shape = 's32[1]{0}', space=sflag, size = 0x4, scoped, tag = 'scoped memory for tpu_custom_call.1']
    %13 = vsyncpa [#allocation4], 0
    // Predicated region
    $region2: #{tpu_custom_call.1} parent=1 // pred_check
      _
    $region3: #{tpu_custom_call.1} parent=1 // pred_check_branch
      %15 = sbr.rel (0) target = $region5
    $region4: #{tpu_custom_call.1} parent=1 // pred_region
      _
    $region5: #{tpu_custom_call.1} parent=1 // pred_fallthru
      _
    // Predicated region
    $region6: #{tpu_custom_call.1} parent=1 // pred_check
      _
    $region7: #{tpu_custom_call.1} parent=1 // pred_check_branch
      %17 = sbr.rel (0) target = $region9
    $region8: #{tpu_custom_call.1} parent=1 // pred_region
      _
    $region9: #{tpu_custom_call.1} parent=1 // pred_fallthru
      _
    // Predicated region
    $region10: #{tpu_custom_call.1} parent=1 // pred_check
      _
    $region11: #{tpu_custom_call.1} parent=1 // pred_check_branch
      %19 = sbr.rel (0) target = $region13
    $region12: #{tpu_custom_call.1} parent=1 // pred_region
      _
    $region13: #{tpu_custom_call.1} parent=1 // pred_fallthru
      _
    // Predicated region
    $region14: #{tpu_custom_call.1} parent=1 // pred_check
      _
    $region15: #{tpu_custom_call.1} parent=1 // pred_check_branch
      %21 = sbr.rel (0) target = $region17
    $region16: #{tpu_custom_call.1} parent=1 // pred_region
      _
    $region17: #{tpu_custom_call.1} parent=1 // pred_fallthru
      _
    // Predicated region
    $region18: #{tpu_custom_call.1} parent=1 // pred_check
      _
    $region19: #{tpu_custom_call.1} parent=1 // pred_check_branch
      %23 = sbr.rel (0) target = $region21
    $region20: #{tpu_custom_call.1} parent=1 // pred_region
      _
    $region21: #{tpu_custom_call.1} parent=1 // pred_fallthru
      _
    // Predicated region
    $region22: #{tpu_custom_call.1} parent=1 // pred_check
      _
    $region23: #{tpu_custom_call.1} parent=1 // pred_check_branch
      %25 = sbr.rel (0) target = $region25
    $region24: #{tpu_custom_call.1} parent=1 // pred_region
      _
    $region25: #{tpu_custom_call.1} parent=1 // pred_fallthru
      _
    // Predicated region
    $region26: #{tpu_custom_call.1} parent=1 // pred_check
      _
    $region27: #{tpu_custom_call.1} parent=1 // pred_check_branch
      %27 = sbr.rel (0) target = $region29
    $region28: #{tpu_custom_call.1} parent=1 // pred_region
      _
    $region29: #{tpu_custom_call.1} parent=1 // pred_fallthru
      _
    // Predicated region
    $region30: #{tpu_custom_call.1} parent=1 // pred_check
      _
    $region31: #{tpu_custom_call.1} parent=1 // pred_check_branch
      %29 = sbr.rel (0) target = $region33
    $region32: #{tpu_custom_call.1} parent=1 // pred_region
      _
    $region33: #{tpu_custom_call.1} parent=1 // pred_fallthru
      _
    %v31 = vld [vmem:[%s0] sm:$0x1]
    %v32 = vunpack.c.l.bf16 %v31
    %v33 = vld [vmem:[%s1] sm:$0x3]
    %v34 = vunpack.c.l.bf16 %v33
    %vm35 = vcmask 64512
    %36 = vst.msk [vmem:[#allocation2] sm:$0xff] %vm35, 0.0
    %37 = vst.msk [vmem:[#allocation2 + $0x8] sm:$0xff] %vm35, 0.0
    %38 = vst.msk [vmem:[#allocation2 + $0x10] sm:$0xff] %vm35, 0.0
    %39 = vst.msk [vmem:[#allocation2 + $0x18] sm:$0xff] %vm35, 0.0
    %vm40 = vcmask 58368
    %41 = vst.msk [vmem:[#allocation2] sm:$0x3] %vm40, %v32
    %vm42 = vcmask 60416
    %43 = vst.msk [vmem:[#allocation2 + $0x8] sm:$0xf] %vm42, %v34
    %v44 = vlaneseq
    %v45 = vshrl.u32 %v44, 7
    %v46 = vsub.s32 0, %v45
    %v47 = vrot.slane %v32, %v46
    %v48 = vmul.f32 %v34, %v47
    %49 = vst.msk [vmem:[#allocation2 + $0x10] sm:$0xf] %vm42, %v48
    %v50 = vlaneseq
    %v51 = vshrl.u32 %v50, 7
    %v52 = vsub.s32 1, %v51
    %v53 = vrot.slane %v32, %v52
    %v54 = vmul.f32 %v34, %v53
    %55 = vst.msk [vmem:[#allocation2 + $0x18] sm:$0xf] %vm42, %v54
    %v56 = vld [vmem:[#allocation2] sm:$0xff]
    %v57 = vld [vmem:[#allocation2 + $0x8] sm:$0xff]
    %v58 = vld [vmem:[#allocation2 + $0x10] sm:$0xff]
    %v59 = vld [vmem:[#allocation2 + $0x18] sm:$0xff]
    %v60 = vpack.c.bf16 %v57, %v56
    %v61 = vpack.c.bf16 %v59, %v58
    %v62 = vld [vmem:[%s2] sm:$0xf]
    %v63 = vld [vmem:[%s2 + $0x4] sm:$0xf]
    %v64 = vld [vmem:[%s2 + $0x8] sm:$0xf]
    %v65 = vld [vmem:[%s2 + $0xc] sm:$0xf]
    %v66 = vld [vmem:[%s2 + $0x10] sm:$0xf]
    %v67 = vld [vmem:[%s2 + $0x14] sm:$0xf]
    %v68 = vld [vmem:[%s2 + $0x18] sm:$0xf]
    %v69 = vld [vmem:[%s2 + $0x1c] sm:$0xf]
    %v70 = vld [vmem:[%s3] sm:$0xff]
    %v71 = vld [vmem:[%s3 + $0x8] sm:$0xff]
    %v72 = vld [vmem:[%s3 + $0x10] sm:$0xff]
    %v73 = vld [vmem:[%s3 + $0x18] sm:$0xff]
    %v74 = vld [vmem:[%s3 + $0x20] sm:$0xff]
    %v75 = vld [vmem:[%s3 + $0x28] sm:$0xff]
    %v76 = vld [vmem:[%s3 + $0x30] sm:$0xff]
    %v77 = vld [vmem:[%s3 + $0x38] sm:$0xff]
    %79 = vset.pattern.permute.xlu0 0
    %80 = vperm.xlu0 %79, %v70
    %v81 = vpop.permute.xlu0 %80
    %84 = vset.pattern.permute.xlu0 0
    %85 = vperm.xlu0 %84, %v71
    %v86 = vpop.permute.xlu0 %85
    %89 = vset.pattern.permute.xlu0 0
    %90 = vperm.xlu0 %89, %v72
    %v91 = vpop.permute.xlu0 %90
    %94 = vset.pattern.permute.xlu0 0
    %95 = vperm.xlu0 %94, %v73
    %v96 = vpop.permute.xlu0 %95
    %99 = vset.pattern.permute.xlu0 0
    %100 = vperm.xlu0 %99, %v74
    %v101 = vpop.permute.xlu0 %100
    %104 = vset.pattern.permute.xlu0 0
    %105 = vperm.xlu0 %104, %v75
    %v106 = vpop.permute.xlu0 %105
    %109 = vset.pattern.permute.xlu0 0
    %110 = vperm.xlu0 %109, %v76
    %v111 = vpop.permute.xlu0 %110
    %114 = vset.pattern.permute.xlu0 0
    %115 = vperm.xlu0 %114, %v77
    %v116 = vpop.permute.xlu0 %115
    %v126 = vunpack.c.l.b16 %v62
    %v127 = vunpack.c.l.b16 %v63
    %v128 = vunpack.c.l.b16 %v64
    %v129 = vunpack.c.l.b16 %v65
    %v130 = vunpack.c.l.b16 %v66
    %v131 = vunpack.c.l.b16 %v67
    %v132 = vunpack.c.l.b16 %v68
    %v133 = vunpack.c.l.b16 %v69
    %v134 = vpack.c.b16 %v127, %v126
    %v135 = vpack.c.b16 %v129, %v128
    %v136 = vpack.c.b16 %v131, %v130
    %v137 = vpack.c.b16 %v133, %v132
    %vm138 = vcmask 261120
    %v140 = vsel %vm138, %v134, 0
    %v143 = vsel %vm138, %v135, 0
    %v146 = vsel %vm138, %v136, 0
    %v149 = vsel %vm138, %v137, 0
    %151 = vmatprep.subr.bf16.mxu0 0
    %152 = vmatpush1.bf16.msra.mxu0 0
    %153 = vmatprep.subr.bf16.mxu0 0
    %154 = vmatpush1.bf16.msra.mxu0 0
    %155 = vmatprep.subr.bf16.mxu0 0
    %156 = vmatpush1.bf16.msra.mxu0 0
    %157 = vmatprep.subr.bf16.mxu0 0
    %158 = vmatpush1.bf16.msra.mxu0 0
    %159 = vmatprep.subr.bf16.mxu0 0
    %160 = vmatpush1.bf16.msra.mxu0 0
    %161 = vmatprep.subr.bf16.mxu0 0
    %162 = vmatpush1.bf16.msra.mxu0 0
    %163 = vmatprep.subr.bf16.mxu0 0
    %164 = vmatpush1.bf16.msra.mxu0 %v61
    %165 = vmatprep.subr.bf16.mxu0 0
    %166 = vmatpush1.bf16.msra.mxu0 %v60
    %167 = vmatprep.subr.bf16.mxu0 0
    %168 = vmatpush2.bf16.msra.mxu0 0
    %169 = vmatprep.subr.bf16.mxu0 0
    %170 = vmatpush2.bf16.msra.mxu0 0
    %171 = vmatprep.subr.bf16.mxu0 0
    %172 = vmatpush2.bf16.msra.mxu0 0
    %173 = vmatprep.subr.bf16.mxu0 0
    %174 = vmatpush2.bf16.msra.mxu0 0
    %175 = vmatprep.subr.bf16.mxu0 0
    %176 = vmatpush2.bf16.msra.mxu0 0
    %177 = vmatprep.subr.bf16.mxu0 0
    %178 = vmatpush2.bf16.msra.mxu0 0
    %179 = vmatprep.subr.bf16.mxu0 0
    %180 = vmatpush2.bf16.msra.mxu0 0
    %181 = vmatprep.subr.bf16.mxu0 0
    %182 = vmatpush2.bf16.msra.mxu0 0
    %183 = vmatprep.mubr.bf16.mxu0 0
    %184 = vmatmul.mubr.bf16.gmra.mxu0 %v140
    %v185 = vpop.f32.mrf.mxu0
    %v186 = vadd.f32 %v81, %v185
    %v187 = vpop.f32.mrf.mxu0
    %v188 = vpop.f32.mrf.mxu0
    %v189 = vadd.f32 %v86, %v188
    %v190 = vpop.f32.mrf.mxu0
    %191 = vmatprep.mubr.bf16.mxu0 0
    %192 = vmatmul.mubr.bf16.gmra.mxu0 %v143
    %v193 = vpop.f32.mrf.mxu0
    %v194 = vadd.f32 %v91, %v193
    %v195 = vpop.f32.mrf.mxu0
    %v196 = vpop.f32.mrf.mxu0
    %v197 = vadd.f32 %v96, %v196
    %v198 = vpop.f32.mrf.mxu0
    %199 = vmatprep.mubr.bf16.mxu0 0
    %200 = vmatmul.mubr.bf16.gmra.mxu0 %v146
    %v201 = vpop.f32.mrf.mxu0
    %v202 = vadd.f32 %v101, %v201
    %v203 = vpop.f32.mrf.mxu0
    %v204 = vpop.f32.mrf.mxu0
    %v205 = vadd.f32 %v106, %v204
    %v206 = vpop.f32.mrf.mxu0
    %207 = vmatprep.mubr.bf16.mxu0 0
    %208 = vmatmul.mubr.bf16.gmra.mxu0 %v149
    %v209 = vpop.f32.mrf.mxu0
    %v210 = vadd.f32 %v111, %v209
    %v211 = vpop.f32.mrf.mxu0
    %v212 = vpop.f32.mrf.mxu0
    %v213 = vadd.f32 %v116, %v212
    %v214 = vpop.f32.mrf.mxu0
    %215 = vdwg.mxu0
    %v216 = vtanh.pop %v186
    %v217 = vtanh.pop %v189
    %v218 = vtanh.pop %v194
    %v219 = vtanh.pop %v197
    %v220 = vtanh.pop %v202
    %v221 = vtanh.pop %v205
    %v222 = vtanh.pop %v210
    %v223 = vtanh.pop %v213
    %v224 = vpack.c.bf16 %v217, %v216
    %v225 = vpack.c.bf16 %v219, %v218
    %v226 = vpack.c.bf16 %v221, %v220
    %v227 = vpack.c.bf16 %v223, %v222
    %v228 = vld [vmem:[%s4] sm:$0xf]
    %v229 = vld [vmem:[%s4 + $0x4] sm:$0xf]
    %v230 = vld [vmem:[%s4 + $0x8] sm:$0xf]
    %v231 = vld [vmem:[%s4 + $0xc] sm:$0xf]
    %v232 = vld [vmem:[%s4 + $0x10] sm:$0xf]
    %v233 = vld [vmem:[%s4 + $0x14] sm:$0xf]
    %v234 = vld [vmem:[%s4 + $0x18] sm:$0xf]
    %v235 = vld [vmem:[%s4 + $0x1c] sm:$0xf]
    %v236 = vld [vmem:[%s5] sm:$0xff]
    %v237 = vld [vmem:[%s5 + $0x8] sm:$0xff]
    %v238 = vld [vmem:[%s5 + $0x10] sm:$0xff]
    %v239 = vld [vmem:[%s5 + $0x18] sm:$0xff]
    %v240 = vld [vmem:[%s5 + $0x20] sm:$0xff]
    %v241 = vld [vmem:[%s5 + $0x28] sm:$0xff]
    %v242 = vld [vmem:[%s5 + $0x30] sm:$0xff]
    %v243 = vld [vmem:[%s5 + $0x38] sm:$0xff]
    %245 = vset.pattern.permute.xlu0 0
    %246 = vperm.xlu0 %245, %v236
    %v247 = vpop.permute.xlu0 %246
    %250 = vset.pattern.permute.xlu0 0
    %251 = vperm.xlu0 %250, %v237
    %v252 = vpop.permute.xlu0 %251
    %255 = vset.pattern.permute.xlu0 0
    %256 = vperm.xlu0 %255, %v238
    %v257 = vpop.permute.xlu0 %256
    %260 = vset.pattern.permute.xlu0 0
    %261 = vperm.xlu0 %260, %v239
    %v262 = vpop.permute.xlu0 %261
    %265 = vset.pattern.permute.xlu0 0
    %266 = vperm.xlu0 %265, %v240
    %v267 = vpop.permute.xlu0 %266
    %270 = vset.pattern.permute.xlu0 0
    %271 = vperm.xlu0 %270, %v241
    %v272 = vpop.permute.xlu0 %271
    %275 = vset.pattern.permute.xlu0 0
    %276 = vperm.xlu0 %275, %v242
    %v277 = vpop.permute.xlu0 %276
    %280 = vset.pattern.permute.xlu0 0
    %281 = vperm.xlu0 %280, %v243
    %v282 = vpop.permute.xlu0 %281
    %v292 = vunpack.c.l.b16 %v228
    %v293 = vunpack.c.l.b16 %v229
    %v294 = vunpack.c.l.b16 %v230
    %v295 = vunpack.c.l.b16 %v231
    %v296 = vunpack.c.l.b16 %v232
    %v297 = vunpack.c.l.b16 %v233
    %v298 = vunpack.c.l.b16 %v234
    %v299 = vunpack.c.l.b16 %v235
    %v300 = vpack.c.b16 %v293, %v292
    %v301 = vpack.c.b16 %v295, %v294
    %v302 = vpack.c.b16 %v297, %v296
    %v303 = vpack.c.b16 %v299, %v298
    %vm304 = vcmask 523264
    %v306 = vsel %vm304, %v300, 0
    %v309 = vsel %vm304, %v301, 0
    %v312 = vsel %vm304, %v302, 0
    %v315 = vsel %vm304, %v303, 0
    %317 = vmatprep.subr.bf16.mxu0 0
    %318 = vmatpush1.bf16.msra.mxu0 0
    %319 = vmatprep.subr.bf16.mxu0 0
    %320 = vmatpush1.bf16.msra.mxu0 0
    %321 = vmatprep.subr.bf16.mxu0 0
    %322 = vmatpush1.bf16.msra.mxu0 0
    %323 = vmatprep.subr.bf16.mxu0 0
    %324 = vmatpush1.bf16.msra.mxu0 0
    %325 = vmatprep.subr.bf16.mxu0 0
    %326 = vmatpush1.bf16.msra.mxu0 %v227
    %327 = vmatprep.subr.bf16.mxu0 0
    %328 = vmatpush1.bf16.msra.mxu0 %v226
    %329 = vmatprep.subr.bf16.mxu0 0
    %330 = vmatpush1.bf16.msra.mxu0 %v225
    %331 = vmatprep.subr.bf16.mxu0 0
    %332 = vmatpush1.bf16.msra.mxu0 %v224
    %333 = vmatprep.subr.bf16.mxu0 0
    %334 = vmatpush2.bf16.msra.mxu0 0
    %335 = vmatprep.subr.bf16.mxu0 0
    %336 = vmatpush2.bf16.msra.mxu0 0
    %337 = vmatprep.subr.bf16.mxu0 0
    %338 = vmatpush2.bf16.msra.mxu0 0
    %339 = vmatprep.subr.bf16.mxu0 0
    %340 = vmatpush2.bf16.msra.mxu0 0
    %341 = vmatprep.subr.bf16.mxu0 0
    %342 = vmatpush2.bf16.msra.mxu0 0
    %343 = vmatprep.subr.bf16.mxu0 0
    %344 = vmatpush2.bf16.msra.mxu0 0
    %345 = vmatprep.subr.bf16.mxu0 0
    %346 = vmatpush2.bf16.msra.mxu0 0
    %347 = vmatprep.subr.bf16.mxu0 0
    %348 = vmatpush2.bf16.msra.mxu0 0
    %349 = vmatprep.mubr.bf16.mxu0 0
    %350 = vmatmul.mubr.bf16.gmra.mxu0 %v306
    %v351 = vpop.f32.mrf.mxu0
    %v352 = vadd.f32 %v247, %v351
    %v353 = vpop.f32.mrf.mxu0
    %v354 = vpop.f32.mrf.mxu0
    %v355 = vadd.f32 %v252, %v354
    %v356 = vpop.f32.mrf.mxu0
    %357 = vmatprep.mubr.bf16.mxu0 0
    %358 = vmatmul.mubr.bf16.gmra.mxu0 %v309
    %v359 = vpop.f32.mrf.mxu0
    %v360 = vadd.f32 %v257, %v359
    %v361 = vpop.f32.mrf.mxu0
    %v362 = vpop.f32.mrf.mxu0
    %v363 = vadd.f32 %v262, %v362
    %v364 = vpop.f32.mrf.mxu0
    %365 = vmatprep.mubr.bf16.mxu0 0
    %366 = vmatmul.mubr.bf16.gmra.mxu0 %v312
    %v367 = vpop.f32.mrf.mxu0
    %v368 = vadd.f32 %v267, %v367
    %v369 = vpop.f32.mrf.mxu0
    %v370 = vpop.f32.mrf.mxu0
    %v371 = vadd.f32 %v272, %v370
    %v372 = vpop.f32.mrf.mxu0
    %373 = vmatprep.mubr.bf16.mxu0 0
    %374 = vmatmul.mubr.bf16.gmra.mxu0 %v315
    %v375 = vpop.f32.mrf.mxu0
    %v376 = vadd.f32 %v277, %v375
    %v377 = vpop.f32.mrf.mxu0
    %v378 = vpop.f32.mrf.mxu0
    %v379 = vadd.f32 %v282, %v378
    %v380 = vpop.f32.mrf.mxu0
    %381 = vdwg.mxu0
    %v382 = vtanh.pop %v352
    %v383 = vtanh.pop %v355
    %v384 = vtanh.pop %v360
    %v385 = vtanh.pop %v363
    %v386 = vtanh.pop %v368
    %v387 = vtanh.pop %v371
    %v388 = vtanh.pop %v376
    %v389 = vtanh.pop %v379
    %v390 = vpack.c.bf16 %v383, %v382
    %v391 = vpack.c.bf16 %v385, %v384
    %v392 = vpack.c.bf16 %v387, %v386
    %v393 = vpack.c.bf16 %v389, %v388
    %v394 = vld [vmem:[%s6] sm:$0x1]
    %v395 = vld [vmem:[%s7] sm:$0x3]
    %397 = vset.pattern.permute.xlu0 0
    %398 = vperm.xlu0 %397, %v395
    %v399 = vpop.permute.xlu0 %398
    %v402 = vsel %vm304, %v394, 0
    %404 = vmatprep.subr.bf16.mxu0 0
    %405 = vmatpush1.bf16.msra.mxu0 0
    %406 = vmatprep.subr.bf16.mxu0 0
    %407 = vmatpush1.bf16.msra.mxu0 0
    %408 = vmatprep.subr.bf16.mxu0 0
    %409 = vmatpush1.bf16.msra.mxu0 0
    %410 = vmatprep.subr.bf16.mxu0 0
    %411 = vmatpush1.bf16.msra.mxu0 0
    %412 = vmatprep.subr.bf16.mxu0 0
    %413 = vmatpush1.bf16.msra.mxu0 %v393
    %414 = vmatprep.subr.bf16.mxu0 0
    %415 = vmatpush1.bf16.msra.mxu0 %v392
    %416 = vmatprep.subr.bf16.mxu0 0
    %417 = vmatpush1.bf16.msra.mxu0 %v391
    %418 = vmatprep.subr.bf16.mxu0 0
    %419 = vmatpush1.bf16.msra.mxu0 %v390
    %420 = vmatprep.subr.bf16.mxu0 0
    %421 = vmatpush2.bf16.msra.mxu0 0
    %422 = vmatprep.subr.bf16.mxu0 0
    %423 = vmatpush2.bf16.msra.mxu0 0
    %424 = vmatprep.subr.bf16.mxu0 0
    %425 = vmatpush2.bf16.msra.mxu0 0
    %426 = vmatprep.subr.bf16.mxu0 0
    %427 = vmatpush2.bf16.msra.mxu0 0
    %428 = vmatprep.subr.bf16.mxu0 0
    %429 = vmatpush2.bf16.msra.mxu0 0
    %430 = vmatprep.subr.bf16.mxu0 0
    %431 = vmatpush2.bf16.msra.mxu0 0
    %432 = vmatprep.subr.bf16.mxu0 0
    %433 = vmatpush2.bf16.msra.mxu0 0
    %434 = vmatprep.subr.bf16.mxu0 0
    %435 = vmatpush2.bf16.msra.mxu0 0
    %436 = vmatprep.mubr.bf16.mxu0 0
    %437 = vmatmul.mubr.bf16.gmra.mxu0 %v402
    %v438 = vpop.f32.mrf.mxu0
    %v439 = vadd.f32 %v399, %v438
    %v440 = vpop.f32.mrf.mxu0
    %v441 = vpop.f32.mrf.mxu0
    %v442 = vpop.f32.mrf.mxu0
    %443 = vdwg.mxu0
    %v444 = vtanh.pop %v439
    %445 = vst.msk [vmem:[#allocation3] sm:$0x3] %vm40, %v444
    // Predicated region
    $region34: #{tpu_custom_call.1} parent=1 // pred_check
      _
    $region35: #{tpu_custom_call.1} parent=1 // pred_check_branch
      %447 = sbr.rel (0) target = $region37
    $region36: #{tpu_custom_call.1} parent=1 // pred_region
      %s449 = ssub.s32 32, 32
      %450 = vsyncadd [#allocation4], %s449
      %s452 = sshll.u32 [#allocation3], 4
      %s453 = int_to_ptr.vmem [resolvable:$true] %s452
      %455 = dma.vmem_to_hbm [thread:$0]  %s453, 32, %s8, [#allocation4]
    $region37: #{tpu_custom_call.1} parent=1 // pred_fallthru
      _
    // Predicated region
    $region38: #{tpu_custom_call.1} parent=1 // pred_check
      _
    $region39: #{tpu_custom_call.1} parent=1 // pred_check_branch
      %457 = sbr.rel (0) target = $region41
    $region40: #{tpu_custom_call.1} parent=1 // pred_region
      %458 = dma.done [#allocation4], 32
    $region41: #{tpu_custom_call.1} parent=1 // pred_fallthru
      _
    %459 = vsyncpa [#allocation4], 1

</llo_original>
